<compile_context>
chip_gen: v7x
topology: tpu7x:2x2x1
jax: 0.10.0
libtpu: 0.0.40
codegen_flags: <defaults>
</compile_context>

<pallas_src>
import jax
import jax.numpy as jnp
from jax.experimental import pallas as pl
from jax.experimental.pallas import tpu as pltpu


def _round_up(n: int, m: int) -> int:
    return ((n + m - 1) // m) * m


def _sigmoid(x):
    # Single-transcendental logistic: sigmoid(x) == 0.5 * tanh(0.5 * x) + 0.5.
    # tanh goes to the EUP; halves transcendental pressure vs exp + divide.
    return 0.5 * jnp.tanh(0.5 * x) + 0.5


def _rencoder_kernel(x_ref, w1_ref, b1_ref, w2_ref, b2_ref,
                     w3_ref, b3_ref, w4_ref, b4_ref, out_ref):
    x = x_ref[...].astype(jnp.float32)
    h = _sigmoid(jnp.dot(x, w1_ref[...], preferred_element_type=jnp.float32) + b1_ref[...])
    h = _sigmoid(jnp.dot(h, w2_ref[...], preferred_element_type=jnp.float32) + b2_ref[...])
    h = _sigmoid(jnp.dot(h, w3_ref[...], preferred_element_type=jnp.float32) + b3_ref[...])
    y = jnp.dot(h, w4_ref[...], preferred_element_type=jnp.float32) + b4_ref[...]
    out_ref[...] = y.astype(out_ref.dtype)


def rencoder_forward(x, w1, b1, w2, b2, w3, b3, w4, b4, *, block_rows=1024):
    """x: (B, in_dim); w_k: (fan_in, fan_out) pre-transposed; b_k: (1, fan_out).
    Returns (B, out_dim), identical math to REncoder.forward."""
    B, in_dim = x.shape
    h1, h2, h3 = w1.shape[1], w2.shape[1], w3.shape[1]
    out_dim = w4.shape[1]

    # --- batch tiling (parallel grid axis) ----------------------------------
    tm = min(block_rows, _round_up(B, 8))          # multiple of 8 (sublane rule)
    # Guarantee >= 2 grid steps when the batch allows it, so the "parallel"
    # axis can shard across both TensorCores on v7x.
    if B >= 16 and pl.cdiv(B, tm) < 2:
        tm = _round_up(pl.cdiv(B, 2), 8)
    grid = (pl.cdiv(B, tm),)

    row_spec = pl.BlockSpec((tm, in_dim), lambda i: (i, 0))       # tiled on rows
    out_spec = pl.BlockSpec((tm, out_dim), lambda i: (i, 0))      # unpadded masked store
    const_spec = lambda shape: pl.BlockSpec(shape, lambda i: (0, 0))  # VMEM-resident

    flops = 2 * B * (in_dim * h1 + h1 * h2 + h2 * h3 + h3 * out_dim)
    transcendentals = B * (h1 + h2 + h3)
    bytes_accessed = 4 * (x.size + w1.size + b1.size + w2.size + b2.size
                          + w3.size + b3.size + w4.size + b4.size
                          + B * out_dim)

    out = pl.pallas_call(
        _rencoder_kernel,
        out_shape=jax.ShapeDtypeStruct((B, out_dim), x.dtype),
        grid=grid,
        in_specs=[
            row_spec,
            const_spec(w1.shape), const_spec(b1.shape),
            const_spec(w2.shape), const_spec(b2.shape),
            const_spec(w3.shape), const_spec(b3.shape),
            const_spec(w4.shape), const_spec(b4.shape),
        ],
        out_specs=out_spec,
        compiler_params=pltpu.CompilerParams(
            dimension_semantics=("parallel",),
            vmem_limit_bytes=32 * 1024 * 1024,   # safe on v5e/v6e/v7x even at tm=4096
        ),
        cost_estimate=pl.CostEstimate(
            flops=flops,
            transcendentals=transcendentals,
            bytes_accessed=bytes_accessed,
        ),
    )(x, w1, b1, w2, b2, w3, b3, w4, b4)

    return out


def init_rencoder_params(key, in_dim, out_dim, dtype=jnp.float32):
    """Synthetic init mirroring REncoder.__init__: weights ~ normal
    (torch.nn.init.normal_), biases ~ PyTorch Linear default uniform(-1/sqrt(fan_in), +).
    Weights are stored pre-transposed as (fan_in, fan_out)."""
    l1, l2, l3 = 64, 32, 16
    dims = [(in_dim, l1), (l1, l2), (l2, l3), (l3, out_dim)]
    keys = jax.random.split(key, 8)
    params = []
    for i, (fi, fo) in enumerate(dims):
        bound = 1.0 / jnp.sqrt(jnp.float32(fi))
        w = jax.random.normal(keys[2 * i], (fi, fo), dtype)
        b = jax.random.uniform(keys[2 * i + 1], (1, fo), dtype, -bound, bound)
        params += [w, b]
    return tuple(params)


def _ref_forward(x, w1, b1, w2, b2, w3, b3, w4, b4):
    s = lambda z: 1.0 / (1.0 + jnp.exp(-z))
    h = s(x @ w1 + b1)
    h = s(h @ w2 + b2)
    h = s(h @ w3 + b3)
    return h @ w4 + b4


if __name__ == "__main__":
    key = jax.random.PRNGKey(0)
    kx, kp = jax.random.split(key)

    # (x_i, y_i) pairs -> representations r_i: small, module-consistent shapes.
    B, in_dim, out_dim = 16, 4, 8
    x = jax.random.normal(kx, (B, in_dim), jnp.float32)
    params = init_rencoder_params(kp, in_dim, out_dim)

    r = rencoder_forward(x, *params)
    jax.block_until_ready(r)

    ref = _ref_forward(x, *params)
    assert r.shape == (B, out_dim), f"bad output shape {r.shape}"
    assert jnp.allclose(r, ref, atol=5e-5, rtol=1e-4), "REncoder output mismatch"

    print("KERNEL_OK")
</pallas_src>

<mosaic_0001>
module attributes {stable_mosaic.version = 11 : i64} {
  func.func @_rencoder_kernel(%arg0: i32, %arg1: memref<8x4xf32, #tpu.memory_space<vmem>>, %arg2: memref<4x64xf32, #tpu.memory_space<vmem>>, %arg3: memref<1x64xf32, #tpu.memory_space<vmem>>, %arg4: memref<64x32xf32, #tpu.memory_space<vmem>>, %arg5: memref<1x32xf32, #tpu.memory_space<vmem>>, %arg6: memref<32x16xf32, #tpu.memory_space<vmem>>, %arg7: memref<1x16xf32, #tpu.memory_space<vmem>>, %arg8: memref<16x8xf32, #tpu.memory_space<vmem>>, %arg9: memref<1x8xf32, #tpu.memory_space<vmem>>, %arg10: memref<8x8xf32, #tpu.memory_space<vmem>>) attributes {dimension_semantics = [#tpu.dimension_semantics<parallel>], iteration_bounds = array<i64: 2>, scalar_prefetch = 0 : i64, scratch_operands = 0 : i64, tpu.core_type = #tpu.core_type<tc>, window_params = [{transform_indices = @transform_0, window_bounds = array<i64: 8, 4>}, {pipeline_mode = #tpu.pipeline_mode<synchronous>, transform_indices = @transform_1, window_bounds = array<i64: 4, 64>}, {pipeline_mode = #tpu.pipeline_mode<synchronous>, transform_indices = @transform_2, window_bounds = array<i64: 1, 64>}, {pipeline_mode = #tpu.pipeline_mode<synchronous>, transform_indices = @transform_3, window_bounds = array<i64: 64, 32>}, {pipeline_mode = #tpu.pipeline_mode<synchronous>, transform_indices = @transform_4, window_bounds = array<i64: 1, 32>}, {pipeline_mode = #tpu.pipeline_mode<synchronous>, transform_indices = @transform_5, window_bounds = array<i64: 32, 16>}, {pipeline_mode = #tpu.pipeline_mode<synchronous>, transform_indices = @transform_6, window_bounds = array<i64: 1, 16>}, {pipeline_mode = #tpu.pipeline_mode<synchronous>, transform_indices = @transform_7, window_bounds = array<i64: 16, 8>}, {pipeline_mode = #tpu.pipeline_mode<synchronous>, transform_indices = @transform_8, window_bounds = array<i64: 1, 8>}, {transform_indices = @transform_9, window_bounds = array<i64: 8, 8>}]} {
    %c0 = arith.constant 0 : index
    %c0_0 = arith.constant 0 : index
    %0 = vector.load %arg1[%c0, %c0_0] : memref<8x4xf32, #tpu.memory_space<vmem>>, vector<8x4xf32>
    %c0_1 = arith.constant 0 : index
    %c0_2 = arith.constant 0 : index
    %1 = vector.load %arg2[%c0_1, %c0_2] : memref<4x64xf32, #tpu.memory_space<vmem>>, vector<4x64xf32>
    %cst = arith.constant dense<0.000000e+00> : vector<8x64xf32>
    %2 = tpu.matmul %0, %1, %cst {dimension_numbers = #tpu.dot_dimension_numbers<[1], [0], [0], [1], [0, 0, 1, 1], [], []>} : vector<8x4xf32>, vector<4x64xf32>, vector<8x64xf32> -> vector<8x64xf32>
    %c0_3 = arith.constant 0 : index
    %c0_4 = arith.constant 0 : index
    %3 = vector.load %arg3[%c0_3, %c0_4] : memref<1x64xf32, #tpu.memory_space<vmem>>, vector<1x64xf32>
    %4 = vector.broadcast %3 : vector<1x64xf32> to vector<8x64xf32>
    %5 = arith.addf %2, %4 : vector<8x64xf32>
    %cst_5 = arith.constant 5.000000e-01 : f32
    %6 = vector.broadcast %cst_5 : f32 to vector<8x64xf32>
    %7 = arith.mulf %6, %5 : vector<8x64xf32>
    %8 = math.tanh %7 : vector<8x64xf32>
    %cst_6 = arith.constant 5.000000e-01 : f32
    %9 = vector.broadcast %cst_6 : f32 to vector<8x64xf32>
    %10 = arith.mulf %9, %8 : vector<8x64xf32>
    %cst_7 = arith.constant 5.000000e-01 : f32
    %11 = vector.broadcast %cst_7 : f32 to vector<8x64xf32>
    %12 = arith.addf %10, %11 : vector<8x64xf32>
    %c0_8 = arith.constant 0 : index
    %c0_9 = arith.constant 0 : index
    %13 = vector.load %arg4[%c0_8, %c0_9] : memref<64x32xf32, #tpu.memory_space<vmem>>, vector<64x32xf32>
    %cst_10 = arith.constant dense<0.000000e+00> : vector<8x32xf32>
    %14 = tpu.matmul %12, %13, %cst_10 {dimension_numbers = #tpu.dot_dimension_numbers<[1], [0], [0], [1], [0, 0, 1, 1], [], []>} : vector<8x64xf32>, vector<64x32xf32>, vector<8x32xf32> -> vector<8x32xf32>
    %c0_11 = arith.constant 0 : index
    %c0_12 = arith.constant 0 : index
    %15 = vector.load %arg5[%c0_11, %c0_12] : memref<1x32xf32, #tpu.memory_space<vmem>>, vector<1x32xf32>
    %16 = vector.broadcast %15 : vector<1x32xf32> to vector<8x32xf32>
    %17 = arith.addf %14, %16 : vector<8x32xf32>
    %cst_13 = arith.constant 5.000000e-01 : f32
    %18 = vector.broadcast %cst_13 : f32 to vector<8x32xf32>
    %19 = arith.mulf %18, %17 : vector<8x32xf32>
    %20 = math.tanh %19 : vector<8x32xf32>
    %cst_14 = arith.constant 5.000000e-01 : f32
    %21 = vector.broadcast %cst_14 : f32 to vector<8x32xf32>
    %22 = arith.mulf %21, %20 : vector<8x32xf32>
    %cst_15 = arith.constant 5.000000e-01 : f32
    %23 = vector.broadcast %cst_15 : f32 to vector<8x32xf32>
    %24 = arith.addf %22, %23 : vector<8x32xf32>
    %c0_16 = arith.constant 0 : index
    %c0_17 = arith.constant 0 : index
    %25 = vector.load %arg6[%c0_16, %c0_17] : memref<32x16xf32, #tpu.memory_space<vmem>>, vector<32x16xf32>
    %cst_18 = arith.constant dense<0.000000e+00> : vector<8x16xf32>
    %26 = tpu.matmul %24, %25, %cst_18 {dimension_numbers = #tpu.dot_dimension_numbers<[1], [0], [0], [1], [0, 0, 1, 1], [], []>} : vector<8x32xf32>, vector<32x16xf32>, vector<8x16xf32> -> vector<8x16xf32>
    %c0_19 = arith.constant 0 : index
    %c0_20 = arith.constant 0 : index
    %27 = vector.load %arg7[%c0_19, %c0_20] : memref<1x16xf32, #tpu.memory_space<vmem>>, vector<1x16xf32>
    %28 = vector.broadcast %27 : vector<1x16xf32> to vector<8x16xf32>
    %29 = arith.addf %26, %28 : vector<8x16xf32>
    %cst_21 = arith.constant 5.000000e-01 : f32
    %30 = vector.broadcast %cst_21 : f32 to vector<8x16xf32>
    %31 = arith.mulf %30, %29 : vector<8x16xf32>
    %32 = math.tanh %31 : vector<8x16xf32>
    %cst_22 = arith.constant 5.000000e-01 : f32
    %33 = vector.broadcast %cst_22 : f32 to vector<8x16xf32>
    %34 = arith.mulf %33, %32 : vector<8x16xf32>
    %cst_23 = arith.constant 5.000000e-01 : f32
    %35 = vector.broadcast %cst_23 : f32 to vector<8x16xf32>
    %36 = arith.addf %34, %35 : vector<8x16xf32>
    %c0_24 = arith.constant 0 : index
    %c0_25 = arith.constant 0 : index
    %37 = vector.load %arg8[%c0_24, %c0_25] : memref<16x8xf32, #tpu.memory_space<vmem>>, vector<16x8xf32>
    %cst_26 = arith.constant dense<0.000000e+00> : vector<8x8xf32>
    %38 = tpu.matmul %36, %37, %cst_26 {dimension_numbers = #tpu.dot_dimension_numbers<[1], [0], [0], [1], [0, 0, 1, 1], [], []>} : vector<8x16xf32>, vector<16x8xf32>, vector<8x8xf32> -> vector<8x8xf32>
    %c0_27 = arith.constant 0 : index
    %c0_28 = arith.constant 0 : index
    %39 = vector.load %arg9[%c0_27, %c0_28] : memref<1x8xf32, #tpu.memory_space<vmem>>, vector<1x8xf32>
    %40 = vector.broadcast %39 : vector<1x8xf32> to vector<8x8xf32>
    %41 = arith.addf %38, %40 : vector<8x8xf32>
    %c0_29 = arith.constant 0 : index
    %c0_30 = arith.constant 0 : index
    %42 = vector.load %arg10[%c0_29, %c0_30] : memref<8x8xf32, #tpu.memory_space<vmem>>, vector<8x8xf32>
    tpu.vector_store %arg10[%c0_29, %c0_30], %41 {strides = array<i32>} : memref<8x8xf32, #tpu.memory_space<vmem>>, vector<8x8xf32>,
    return
  }
  func.func @transform_0(%arg0: i32) -> (i32, i32) {
    %c0_i32 = arith.constant 0 : i32
    %c0_i32_0 = arith.constant 0 : i32
    return %arg0, %c0_i32 : i32, i32
  }
  func.func @transform_1(%arg0: i32) -> (i32, i32) {
    %c0_i32 = arith.constant 0 : i32
    %c0_i32_0 = arith.constant 0 : i32
    %c0_i32_1 = arith.constant 0 : i32
    return %c0_i32, %c0_i32_0 : i32, i32
  }
  func.func @transform_2(%arg0: i32) -> (i32, i32) {
    %c0_i32 = arith.constant 0 : i32
    %c0_i32_0 = arith.constant 0 : i32
    %c0_i32_1 = arith.constant 0 : i32
    return %c0_i32, %c0_i32_0 : i32, i32
  }
  func.func @transform_3(%arg0: i32) -> (i32, i32) {
    %c0_i32 = arith.constant 0 : i32
    %c0_i32_0 = arith.constant 0 : i32
    %c0_i32_1 = arith.constant 0 : i32
    return %c0_i32, %c0_i32_0 : i32, i32
  }
  func.func @transform_4(%arg0: i32) -> (i32, i32) {
    %c0_i32 = arith.constant 0 : i32
    %c0_i32_0 = arith.constant 0 : i32
    %c0_i32_1 = arith.constant 0 : i32
    return %c0_i32, %c0_i32_0 : i32, i32
  }
  func.func @transform_5(%arg0: i32) -> (i32, i32) {
    %c0_i32 = arith.constant 0 : i32
    %c0_i32_0 = arith.constant 0 : i32
    %c0_i32_1 = arith.constant 0 : i32
    return %c0_i32, %c0_i32_0 : i32, i32
  }
  func.func @transform_6(%arg0: i32) -> (i32, i32) {
    %c0_i32 = arith.constant 0 : i32
    %c0_i32_0 = arith.constant 0 : i32
    %c0_i32_1 = arith.constant 0 : i32
    return %c0_i32, %c0_i32_0 : i32, i32
  }
  func.func @transform_7(%arg0: i32) -> (i32, i32) {
    %c0_i32 = arith.constant 0 : i32
    %c0_i32_0 = arith.constant 0 : i32
    %c0_i32_1 = arith.constant 0 : i32
    return %c0_i32, %c0_i32_0 : i32, i32
  }
  func.func @transform_8(%arg0: i32) -> (i32, i32) {
    %c0_i32 = arith.constant 0 : i32
    %c0_i32_0 = arith.constant 0 : i32
    %c0_i32_1 = arith.constant 0 : i32
    return %c0_i32, %c0_i32_0 : i32, i32
  }
  func.func @transform_9(%arg0: i32) -> (i32, i32) {
    %c0_i32 = arith.constant 0 : i32
    %c0_i32_0 = arith.constant 0 : i32
    return %arg0, %c0_i32 : i32, i32
  }
}

</mosaic_0001>

<llo_original>
// kernel: tpu_custom_call.1
$region0: #{tpu_custom_call.1}
  #allocation0 [shape = 'u32[]', space=smem, size = 0x4, offset = 0x4, fixed_abs, tag = 'smem constant byte address 0x4 - core index']
  #allocation1 [shape = 'u32[144,128]{1,0:T(1,128)}', space=vmem, size = 0x12000, scoped, tag = 'internal scratch']
  %s0 = inlined_call_operand.vmem [shape: f32[16,4], index: 0, kind: input, shape index: {}]
  %s1 = inlined_call_operand.vmem [shape: f32[4,64], index: 1, kind: input, shape index: {}]
  %s2 = inlined_call_operand.vmem [shape: f32[1,64], index: 2, kind: input, shape index: {}]
  %s3 = inlined_call_operand.vmem [shape: f32[64,32], index: 3, kind: input, shape index: {}]
  %s4 = inlined_call_operand.vmem [shape: f32[1,32], index: 4, kind: input, shape index: {}]
  %s5 = inlined_call_operand.vmem [shape: f32[32,16], index: 5, kind: input, shape index: {}]
  %s6 = inlined_call_operand.vmem [shape: f32[1,16], index: 6, kind: input, shape index: {}]
  %s7 = inlined_call_operand.vmem [shape: f32[16,8], index: 7, kind: input, shape index: {}]
  %s8 = inlined_call_operand.vmem [shape: f32[1,8], index: 8, kind: input, shape index: {}]
  %s9 = inlined_call_operand.vmem [shape: f32[16,8], index: 9, kind: output, shape index: {}]
  %s10 = sld [smem:[#allocation0]]
  $region69: #{tpu_custom_call.1} parent=0
    _
  %s12 = ssub.s32 1, %s10
  %s13 = scalar_select 0, %s12, %s10
  loop: start=0, step=1, limit=4
  $region2: #{tpu_custom_call.1} parent=0 // loop_pre_header
    _
  $region3: #{tpu_custom_call.1} parent=0 // loop_header
    %s15 = sphi 0, %s19
    %p16 = scmp.ge.s32.totalorder %s15, 4
    %s25 = sphi 0, %s27
    %s28 = sphi 0, %s25
    %s29 = sphi 0, %s28
    %s45 = sphi 0, %s29
    %s49 = sphi 0, %s49
    %s51 = sphi 0, %s49
    %s52 = sphi 0, %s51
    %s66 = sphi 0, %s52
    %s70 = sphi 0, %s70
    %s72 = sphi 0, %s70
    %s73 = sphi 0, %s72
    %s87 = sphi 0, %s73
    %s91 = sphi 0, %s91
    %s93 = sphi 0, %s91
    %s94 = sphi 0, %s93
    %s108 = sphi 0, %s94
    %s112 = sphi 0, %s112
    %s114 = sphi 0, %s112
    %s115 = sphi 0, %s114
    %s129 = sphi 0, %s115
    %s133 = sphi 0, %s133
    %s135 = sphi 0, %s133
    %s136 = sphi 0, %s135
    %s150 = sphi 0, %s136
    %s154 = sphi 0, %s154
    %s156 = sphi 0, %s154
    %s157 = sphi 0, %s156
    %s171 = sphi 0, %s157
    %s175 = sphi 0, %s175
    %s177 = sphi 0, %s175
    %s178 = sphi 0, %s177
    %s192 = sphi 0, %s178
    %s196 = sphi 0, %s196
    %s198 = sphi 0, %s196
    %s199 = sphi 0, %s198
    %s213 = sphi 0, %s199
    %s219 = sphi 0, %s221
    %s222 = sphi 0, %s219
    %s223 = sphi 0, %s222
    %s239 = sphi 0, %s223
  $region4: #{tpu_custom_call.1} parent=0 // loop_header_branch
    %18 = sbr.rel (%p16) target = $region8
  $region5: #{tpu_custom_call.1} parent=0 // loop_body
    %s20 = ssub.s32 %s15, 1
    %s21 = ssub.s32 %s15, 2
    %s22 = sadd.s32 %s15, 1
    %s23 = ssub.s32 %s15, %s22
    %p24 = scmp.eq.s32.totalorder %s23, 0
    %s26 = sadd.s32 %s25, 1
    %s27 = scalar_select %p24, %s25, %s26
    %p30 = pneg %p24
    %p31 = scmp.eq.s32.totalorder %s15, 1
    %p32 = por %p30, %p31
    %p33 = scmp.ne.s32.totalorder %s25, %s28
    %p34 = scmp.eq.s32.totalorder %s15, 0
    %p35 = por %p33, %p34
    %p36 = scmp.ne.s32.totalorder %s25, %s28
    %p37 = scmp.eq.s32.totalorder %s20, 1
    %p38 = por %p36, %p37
    %p39 = scmp.ne.s32.totalorder %s28, %s29
    %p40 = scmp.eq.s32.totalorder %s20, 0
    %p41 = por %p39, %p40
    %p42 = scmp.ne.s32.totalorder %s28, %s29
    %p43 = scmp.eq.s32.totalorder %s21, 1
    %p44 = por %p42, %p43
    %p46 = scmp.ne.s32.totalorder %s29, %s45
    %p47 = scmp.eq.s32.totalorder %s21, 0
    %p48 = por %p46, %p47
    %s50 = sadd.s32 %s49, 1
    %p53 = scmp.eq.s32.totalorder %s15, 1
    %p54 = scmp.ne.s32.totalorder %s49, %s51
    %p55 = scmp.eq.s32.totalorder %s15, 0
    %p56 = por %p54, %p55
    %p57 = scmp.ne.s32.totalorder %s49, %s51
    %p58 = scmp.eq.s32.totalorder %s20, 1
    %p59 = por %p57, %p58
    %p60 = scmp.ne.s32.totalorder %s51, %s52
    %p61 = scmp.eq.s32.totalorder %s20, 0
    %p62 = por %p60, %p61
    %p63 = scmp.ne.s32.totalorder %s51, %s52
    %p64 = scmp.eq.s32.totalorder %s21, 1
    %p65 = por %p63, %p64
    %p67 = scmp.ne.s32.totalorder %s52, %s66
    %p68 = scmp.eq.s32.totalorder %s21, 0
    %p69 = por %p67, %p68
    %s71 = sadd.s32 %s70, 1
    %p74 = scmp.eq.s32.totalorder %s15, 1
    %p75 = scmp.ne.s32.totalorder %s70, %s72
    %p76 = scmp.eq.s32.totalorder %s15, 0
    %p77 = por %p75, %p76
    %p78 = scmp.ne.s32.totalorder %s70, %s72
    %p79 = scmp.eq.s32.totalorder %s20, 1
    %p80 = por %p78, %p79
    %p81 = scmp.ne.s32.totalorder %s72, %s73
    %p82 = scmp.eq.s32.totalorder %s20, 0
    %p83 = por %p81, %p82
    %p84 = scmp.ne.s32.totalorder %s72, %s73
    %p85 = scmp.eq.s32.totalorder %s21, 1
    %p86 = por %p84, %p85
    %p88 = scmp.ne.s32.totalorder %s73, %s87
    %p89 = scmp.eq.s32.totalorder %s21, 0
    %p90 = por %p88, %p89
    %s92 = sadd.s32 %s91, 1
    %p95 = scmp.eq.s32.totalorder %s15, 1
    %p96 = scmp.ne.s32.totalorder %s91, %s93
    %p97 = scmp.eq.s32.totalorder %s15, 0
    %p98 = por %p96, %p97
    %p99 = scmp.ne.s32.totalorder %s91, %s93
    %p100 = scmp.eq.s32.totalorder %s20, 1
    %p101 = por %p99, %p100
    %p102 = scmp.ne.s32.totalorder %s93, %s94
    %p103 = scmp.eq.s32.totalorder %s20, 0
    %p104 = por %p102, %p103
    %p105 = scmp.ne.s32.totalorder %s93, %s94
    %p106 = scmp.eq.s32.totalorder %s21, 1
    %p107 = por %p105, %p106
    %p109 = scmp.ne.s32.totalorder %s94, %s108
    %p110 = scmp.eq.s32.totalorder %s21, 0
    %p111 = por %p109, %p110
    %s113 = sadd.s32 %s112, 1
    %p116 = scmp.eq.s32.totalorder %s15, 1
    %p117 = scmp.ne.s32.totalorder %s112, %s114
    %p118 = scmp.eq.s32.totalorder %s15, 0
    %p119 = por %p117, %p118
    %p120 = scmp.ne.s32.totalorder %s112, %s114
    %p121 = scmp.eq.s32.totalorder %s20, 1
    %p122 = por %p120, %p121
    %p123 = scmp.ne.s32.totalorder %s114, %s115
    %p124 = scmp.eq.s32.totalorder %s20, 0
    %p125 = por %p123, %p124
    %p126 = scmp.ne.s32.totalorder %s114, %s115
    %p127 = scmp.eq.s32.totalorder %s21, 1
    %p128 = por %p126, %p127
    %p130 = scmp.ne.s32.totalorder %s115, %s129
    %p131 = scmp.eq.s32.totalorder %s21, 0
    %p132 = por %p130, %p131
    %s134 = sadd.s32 %s133, 1
    %p137 = scmp.eq.s32.totalorder %s15, 1
    %p138 = scmp.ne.s32.totalorder %s133, %s135
    %p139 = scmp.eq.s32.totalorder %s15, 0
    %p140 = por %p138, %p139
    %p141 = scmp.ne.s32.totalorder %s133, %s135
    %p142 = scmp.eq.s32.totalorder %s20, 1
    %p143 = por %p141, %p142
    %p144 = scmp.ne.s32.totalorder %s135, %s136
    %p145 = scmp.eq.s32.totalorder %s20, 0
    %p146 = por %p144, %p145
    %p147 = scmp.ne.s32.totalorder %s135, %s136
    %p148 = scmp.eq.s32.totalorder %s21, 1
    %p149 = por %p147, %p148
    %p151 = scmp.ne.s32.totalorder %s136, %s150
    %p152 = scmp.eq.s32.totalorder %s21, 0
    %p153 = por %p151, %p152
    %s155 = sadd.s32 %s154, 1
    %p158 = scmp.eq.s32.totalorder %s15, 1
    %p159 = scmp.ne.s32.totalorder %s154, %s156
    %p160 = scmp.eq.s32.totalorder %s15, 0
    %p161 = por %p159, %p160
    %p162 = scmp.ne.s32.totalorder %s154, %s156
    %p163 = scmp.eq.s32.totalorder %s20, 1
    %p164 = por %p162, %p163
    %p165 = scmp.ne.s32.totalorder %s156, %s157
    %p166 = scmp.eq.s32.totalorder %s20, 0
    %p167 = por %p165, %p166
    %p168 = scmp.ne.s32.totalorder %s156, %s157
    %p169 = scmp.eq.s32.totalorder %s21, 1
    %p170 = por %p168, %p169
    %p172 = scmp.ne.s32.totalorder %s157, %s171
    %p173 = scmp.eq.s32.totalorder %s21, 0
    %p174 = por %p172, %p173
    %s176 = sadd.s32 %s175, 1
    %p179 = scmp.eq.s32.totalorder %s15, 1
    %p180 = scmp.ne.s32.totalorder %s175, %s177
    %p181 = scmp.eq.s32.totalorder %s15, 0
    %p182 = por %p180, %p181
    %p183 = scmp.ne.s32.totalorder %s175, %s177
    %p184 = scmp.eq.s32.totalorder %s20, 1
    %p185 = por %p183, %p184
    %p186 = scmp.ne.s32.totalorder %s177, %s178
    %p187 = scmp.eq.s32.totalorder %s20, 0
    %p188 = por %p186, %p187
    %p189 = scmp.ne.s32.totalorder %s177, %s178
    %p190 = scmp.eq.s32.totalorder %s21, 1
    %p191 = por %p189, %p190
    %p193 = scmp.ne.s32.totalorder %s178, %s192
    %p194 = scmp.eq.s32.totalorder %s21, 0
    %p195 = por %p193, %p194
    %s197 = sadd.s32 %s196, 1
    %p200 = scmp.eq.s32.totalorder %s15, 1
    %p201 = scmp.ne.s32.totalorder %s196, %s198
    %p202 = scmp.eq.s32.totalorder %s15, 0
    %p203 = por %p201, %p202
    %p204 = scmp.ne.s32.totalorder %s196, %s198
    %p205 = scmp.eq.s32.totalorder %s20, 1
    %p206 = por %p204, %p205
    %p207 = scmp.ne.s32.totalorder %s198, %s199
    %p208 = scmp.eq.s32.totalorder %s20, 0
    %p209 = por %p207, %p208
    %p210 = scmp.ne.s32.totalorder %s198, %s199
    %p211 = scmp.eq.s32.totalorder %s21, 1
    %p212 = por %p210, %p211
    %p214 = scmp.ne.s32.totalorder %s199, %s213
    %p215 = scmp.eq.s32.totalorder %s21, 0
    %p216 = por %p214, %p215
    %s217 = ssub.s32 %s15, %s22
    %p218 = scmp.eq.s32.totalorder %s217, 0
    %s220 = sadd.s32 %s219, 1
    %s221 = scalar_select %p218, %s219, %s220
    %p224 = pneg %p218
    %p225 = scmp.eq.s32.totalorder %s15, 1
    %p226 = por %p224, %p225
    %p227 = scmp.ne.s32.totalorder %s219, %s222
    %p228 = scmp.eq.s32.totalorder %s15, 0
    %p229 = por %p227, %p228
    %p230 = scmp.ne.s32.totalorder %s219, %s222
    %p231 = scmp.eq.s32.totalorder %s20, 1
    %p232 = por %p230, %p231
    %p233 = scmp.ne.s32.totalorder %s222, %s223
    %p234 = scmp.eq.s32.totalorder %s20, 0
    %p235 = por %p233, %p234
    %p236 = scmp.ne.s32.totalorder %s222, %s223
    %p237 = scmp.eq.s32.totalorder %s21, 1
    %p238 = por %p236, %p237
    %p240 = scmp.ne.s32.totalorder %s223, %s239
    %p241 = scmp.eq.s32.totalorder %s21, 0
    %p242 = por %p240, %p241
    %p243 = scmp.le.s32.totalorder 1, %s15
    %p244 = scmp.lt.s32.totalorder %s15, 3
    %p245 = pnand %p243, %p244
    %p246 = pneg %p245
    // Predicated region
    $region9: #{tpu_custom_call.1} parent=5 // pred_check
      _
    $region10: #{tpu_custom_call.1} parent=5 // pred_check_branch
      %248 = sbr.rel (%p245) target = $region12
    $region11: #{tpu_custom_call.1} parent=5 // pred_region
      %s249 = ssub.s32 %s15, 1
      // Predicated region
      $region13: #{tpu_custom_call.1} parent=11 // pred_check
        %p250 = pneg %p62
      $region14: #{tpu_custom_call.1} parent=11 // pred_check_branch
        %252 = sbr.rel (%p250) target = $region16
      $region15: #{tpu_custom_call.1} parent=11 // pred_region
        _
      $region16: #{tpu_custom_call.1} parent=11 // pred_fallthru
        _
      // Predicated region
      $region17: #{tpu_custom_call.1} parent=11 // pred_check
        %p253 = pneg %p83
      $region18: #{tpu_custom_call.1} parent=11 // pred_check_branch
        %255 = sbr.rel (%p253) target = $region20
      $region19: #{tpu_custom_call.1} parent=11 // pred_region
        _
      $region20: #{tpu_custom_call.1} parent=11 // pred_fallthru
        _
      // Predicated region
      $region21: #{tpu_custom_call.1} parent=11 // pred_check
        %p256 = pneg %p104
      $region22: #{tpu_custom_call.1} parent=11 // pred_check_branch
        %258 = sbr.rel (%p256) target = $region24
      $region23: #{tpu_custom_call.1} parent=11 // pred_region
        _
      $region24: #{tpu_custom_call.1} parent=11 // pred_fallthru
        _
      // Predicated region
      $region25: #{tpu_custom_call.1} parent=11 // pred_check
        %p259 = pneg %p125
      $region26: #{tpu_custom_call.1} parent=11 // pred_check_branch
        %261 = sbr.rel (%p259) target = $region28
      $region27: #{tpu_custom_call.1} parent=11 // pred_region
        _
      $region28: #{tpu_custom_call.1} parent=11 // pred_fallthru
        _
      // Predicated region
      $region29: #{tpu_custom_call.1} parent=11 // pred_check
        %p262 = pneg %p146
      $region30: #{tpu_custom_call.1} parent=11 // pred_check_branch
        %264 = sbr.rel (%p262) target = $region32
      $region31: #{tpu_custom_call.1} parent=11 // pred_region
        _
      $region32: #{tpu_custom_call.1} parent=11 // pred_fallthru
        _
      // Predicated region
      $region33: #{tpu_custom_call.1} parent=11 // pred_check
        %p265 = pneg %p167
      $region34: #{tpu_custom_call.1} parent=11 // pred_check_branch
        %267 = sbr.rel (%p265) target = $region36
      $region35: #{tpu_custom_call.1} parent=11 // pred_region
        _
      $region36: #{tpu_custom_call.1} parent=11 // pred_fallthru
        _
      // Predicated region
      $region37: #{tpu_custom_call.1} parent=11 // pred_check
        %p268 = pneg %p188
      $region38: #{tpu_custom_call.1} parent=11 // pred_check_branch
        %270 = sbr.rel (%p268) target = $region40
      $region39: #{tpu_custom_call.1} parent=11 // pred_region
        _
      $region40: #{tpu_custom_call.1} parent=11 // pred_fallthru
        _
      // Predicated region
      $region41: #{tpu_custom_call.1} parent=11 // pred_check
        %p271 = pneg %p209
      $region42: #{tpu_custom_call.1} parent=11 // pred_check_branch
        %273 = sbr.rel (%p271) target = $region44
      $region43: #{tpu_custom_call.1} parent=11 // pred_region
        _
      $region44: #{tpu_custom_call.1} parent=11 // pred_fallthru
        _
    $region12: #{tpu_custom_call.1} parent=5 // pred_fallthru
      _
    %p274 = scmp.lt.s32.totalorder %s15, 2
    // Predicated region
    $region45: #{tpu_custom_call.1} parent=5 // pred_check
      %p275 = pneg %p274
    $region46: #{tpu_custom_call.1} parent=5 // pred_check_branch
      %277 = sbr.rel (%p275) target = $region48
    $region47: #{tpu_custom_call.1} parent=5 // pred_region
      // Predicated region
      $region49: #{tpu_custom_call.1} parent=47 // pred_check
        %p278 = pneg %p35
      $region50: #{tpu_custom_call.1} parent=47 // pred_check_branch
        %280 = sbr.rel (%p278) target = $region52
      $region51: #{tpu_custom_call.1} parent=47 // pred_region
        %p281 = scmp.lt.s32.totalorder %s15, 1
        %s282 = scalar_select %p281, %s15, 1
        %s283 = smul.addr %s282, 8
        %s284 = scalar_lea.vmem %s0, %s283
      $region52: #{tpu_custom_call.1} parent=47 // pred_fallthru
        _
    $region48: #{tpu_custom_call.1} parent=5 // pred_fallthru
      _
    %p285 = scmp.le.s32.totalorder 1, %s15
    %p286 = scmp.lt.s32.totalorder %s15, 3
    %p287 = pnand %p285, %p286
    %p288 = pneg %p287
    // Predicated region
    $region53: #{tpu_custom_call.1} parent=5 // pred_check
      _
    $region54: #{tpu_custom_call.1} parent=5 // pred_check_branch
      %290 = sbr.rel (%p287) target = $region56
    $region55: #{tpu_custom_call.1} parent=5 // pred_region
      %s291 = ssub.s32 %s15, 1
      %p292 = scmp.lt.s32.totalorder %s20, 1
      %s293 = scalar_select %p292, %s20, 1
      %s294 = smul.addr %s293, 8
      %s295 = scalar_lea.vmem %s0, %s294
      %p296 = pneg %p41
      %p297 = pneg %p38
      %p298 = pneg %p62
      %p299 = pneg %p59
      %p300 = pneg %p83
      %p301 = pneg %p80
      %p302 = pneg %p104
      %p303 = pneg %p101
      %p304 = pneg %p125
      %p305 = pneg %p122
      %p306 = pneg %p146
      %p307 = pneg %p143
      %p308 = pneg %p167
      %p309 = pneg %p164
      %p310 = pneg %p188
      %p311 = pneg %p185
      %p312 = pneg %p209
      %p313 = pneg %p206
      %p314 = pneg %p235
      %p315 = pneg %p232
      %p316 = scmp.lt.s32.totalorder %s20, 1
      %s317 = scalar_select %p316, %s20, 1
      %s318 = smul.addr %s317, 8
      %s319 = scalar_lea.vmem %s9, %s318
      %p320 = scmp.lt.s32.totalorder %s20, 1
      %s321 = scalar_select %p320, %s20, 1
      %s322 = smul.addr %s321, 8
      %s323 = scalar_lea.vmem %s0, %s322
      %p324 = scmp.lt.s32.totalorder %s20, 1
      %s325 = scalar_select %p324, %s20, 1
      %s326 = smul.addr %s325, 8
      %s327 = scalar_lea.vmem %s9, %s326
      %v328 = vld [vmem:[%s323] sm:$0xff]
      %v329 = vld [vmem:[%s1] sm:$0xf]
      %v330 = vld [vmem:[%s2] sm:$0x1]
      %v332 = vlaneseq
      %v333 = vshrl.u32 %v332, 7
      %v334 = vsub.s32 0, %v333
      %v335 = vrot.slane %v330, %v334
      %vm337 = vcmask 31744
      %v339 = vsel %vm337, %v328, 0
      %vm341 = vcmask 1043456
      %v343 = vsel %vm341, %v329, 0
      %345 = vmatprep.subr.mxu0 0.0
      %346 = vmatpush1.msra.mxu0 %v343
      %347 = vmatprep.subr.mxu0 0.0
      %348 = vmatpush1.msra.mxu0 0.0
      %349 = vmatprep.subr.mxu0 0.0
      %350 = vmatpush1.msra.mxu0 0.0
      %351 = vmatprep.subr.mxu0 0.0
      %352 = vmatpush1.msra.mxu0 0.0
      %353 = vmatprep.subr.mxu0 0.0
      %354 = vmatpush1.msra.mxu0 0.0
      %355 = vmatprep.subr.mxu0 0.0
      %356 = vmatpush1.msra.mxu0 0.0
      %357 = vmatprep.subr.mxu0 0.0
      %358 = vmatpush1.msra.mxu0 0.0
      %359 = vmatprep.subr.mxu0 0.0
      %360 = vmatpush1.msra.mxu0 0.0
      %361 = vmatprep.subr.mxu0 0.0
      %362 = vmatpush1.msra.mxu0 0.0
      %363 = vmatprep.subr.mxu0 0.0
      %364 = vmatpush1.msra.mxu0 0.0
      %365 = vmatprep.subr.mxu0 0.0
      %366 = vmatpush1.msra.mxu0 0.0
      %367 = vmatprep.subr.mxu0 0.0
      %368 = vmatpush1.msra.mxu0 0.0
      %369 = vmatprep.subr.mxu0 0.0
      %370 = vmatpush1.msra.mxu0 0.0
      %371 = vmatprep.subr.mxu0 0.0
      %372 = vmatpush1.msra.mxu0 0.0
      %373 = vmatprep.subr.mxu0 0.0
      %374 = vmatpush1.msra.mxu0 0.0
      %375 = vmatprep.subr.mxu0 0.0
      %376 = vmatpush1.msra.mxu0 0.0
      %377 = vmatprep.subr.mxu0 0.0
      %378 = vmatpush1.msra.mxu0 0.0
      %379 = vmatprep.subr.mxu0 0.0
      %380 = vmatpush1.msra.mxu0 0.0
      %381 = vmatprep.subr.mxu0 0.0
      %382 = vmatpush1.msra.mxu0 0.0
      %383 = vmatprep.subr.mxu0 0.0
      %384 = vmatpush1.msra.mxu0 0.0
      %385 = vmatprep.subr.mxu0 0.0
      %386 = vmatpush1.msra.mxu0 0.0
      %387 = vmatprep.subr.mxu0 0.0
      %388 = vmatpush1.msra.mxu0 0.0
      %389 = vmatprep.subr.mxu0 0.0
      %390 = vmatpush1.msra.mxu0 0.0
      %391 = vmatprep.subr.mxu0 0.0
      %392 = vmatpush1.msra.mxu0 0.0
      %393 = vmatprep.subr.mxu0 0.0
      %394 = vmatpush1.msra.mxu0 0.0
      %395 = vmatprep.subr.mxu0 0.0
      %396 = vmatpush1.msra.mxu0 0.0
      %397 = vmatprep.subr.mxu0 0.0
      %398 = vmatpush1.msra.mxu0 0.0
      %399 = vmatprep.subr.mxu0 0.0
      %400 = vmatpush1.msra.mxu0 0.0
      %401 = vmatprep.subr.mxu0 0.0
      %402 = vmatpush1.msra.mxu0 0.0
      %403 = vmatprep.subr.mxu0 0.0
      %404 = vmatpush1.msra.mxu0 0.0
      %405 = vmatprep.subr.mxu0 0.0
      %406 = vmatpush1.msra.mxu0 0.0
      %407 = vmatprep.subr.mxu0 0.0
      %408 = vmatpush1.msra.mxu0 0.0
      %409 = vmatprep.mubr.f32.mxu0 0.0
      %410 = vmatmul.mubr.f32.gmra.mrb[0].mxu0 %v339
      %v411 = vpop.f32.mrb[0].mxu0
      %v412 = vadd.f32 %v335, %v411
      %v413 = vpop.f32.mrb[0].mxu0
      %414 = vdwg.mxu0
      %v415 = vmul.f32 %v412, 0.5
      %v416 = vtanh.pop %v415
      %v417 = vmul.f32 %v416, 0.5
      %v418 = vadd.f32 %v417, 0.5
      %v419 = vld [vmem:[%s3] sm:$0xff]
      %v420 = vld [vmem:[%s3 + $0x8] sm:$0xff]
      %v421 = vld [vmem:[%s3 + $0x10] sm:$0xff]
      %v422 = vld [vmem:[%s3 + $0x18] sm:$0xff]
      %v423 = vld [vmem:[%s3 + $0x20] sm:$0xff]
      %v424 = vld [vmem:[%s3 + $0x28] sm:$0xff]
      %v425 = vld [vmem:[%s3 + $0x30] sm:$0xff]
      %v426 = vld [vmem:[%s3 + $0x38] sm:$0xff]
      %v427 = vld [vmem:[%s4] sm:$0x1]
      %v429 = vlaneseq
      %v430 = vshrl.u32 %v429, 7
      %v431 = vsub.s32 0, %v430
      %v432 = vrot.slane %v427, %v431
      %vm434 = vcmask 523264
      %v436 = vsel %vm434, %v418, 0
      %438 = vmatprep.subr.mxu0 0.0
      %439 = vmatpush1.msra.mxu0 %v419
      %440 = vmatprep.subr.mxu0 0.0
      %441 = vmatpush1.msra.mxu0 %v420
      %442 = vmatprep.subr.mxu0 0.0
      %443 = vmatpush1.msra.mxu0 %v421
      %444 = vmatprep.subr.mxu0 0.0
      %445 = vmatpush1.msra.mxu0 %v422
      %446 = vmatprep.subr.mxu0 0.0
      %447 = vmatpush1.msra.mxu0 %v423
      %448 = vmatprep.subr.mxu0 0.0
      %449 = vmatpush1.msra.mxu0 %v424
      %450 = vmatprep.subr.mxu0 0.0
      %451 = vmatpush1.msra.mxu0 %v425
      %452 = vmatprep.subr.mxu0 0.0
      %453 = vmatpush1.msra.mxu0 %v426
      %454 = vmatprep.subr.mxu0 0.0
      %455 = vmatpush1.msra.mxu0 0.0
      %456 = vmatprep.subr.mxu0 0.0
      %457 = vmatpush1.msra.mxu0 0.0
      %458 = vmatprep.subr.mxu0 0.0
      %459 = vmatpush1.msra.mxu0 0.0
      %460 = vmatprep.subr.mxu0 0.0
      %461 = vmatpush1.msra.mxu0 0.0
      %462 = vmatprep.subr.mxu0 0.0
      %463 = vmatpush1.msra.mxu0 0.0
      %464 = vmatprep.subr.mxu0 0.0
      %465 = vmatpush1.msra.mxu0 0.0
      %466 = vmatprep.subr.mxu0 0.0
      %467 = vmatpush1.msra.mxu0 0.0
      %468 = vmatprep.subr.mxu0 0.0
      %469 = vmatpush1.msra.mxu0 0.0
      %470 = vmatprep.subr.mxu0 0.0
      %471 = vmatpush1.msra.mxu0 0.0
      %472 = vmatprep.subr.mxu0 0.0
      %473 = vmatpush1.msra.mxu0 0.0
      %474 = vmatprep.subr.mxu0 0.0
      %475 = vmatpush1.msra.mxu0 0.0
      %476 = vmatprep.subr.mxu0 0.0
      %477 = vmatpush1.msra.mxu0 0.0
      %478 = vmatprep.subr.mxu0 0.0
      %479 = vmatpush1.msra.mxu0 0.0
      %480 = vmatprep.subr.mxu0 0.0
      %481 = vmatpush1.msra.mxu0 0.0
      %482 = vmatprep.subr.mxu0 0.0
      %483 = vmatpush1.msra.mxu0 0.0
      %484 = vmatprep.subr.mxu0 0.0
      %485 = vmatpush1.msra.mxu0 0.0
      %486 = vmatprep.subr.mxu0 0.0
      %487 = vmatpush1.msra.mxu0 0.0
      %488 = vmatprep.subr.mxu0 0.0
      %489 = vmatpush1.msra.mxu0 0.0
      %490 = vmatprep.subr.mxu0 0.0
      %491 = vmatpush1.msra.mxu0 0.0
      %492 = vmatprep.subr.mxu0 0.0
      %493 = vmatpush1.msra.mxu0 0.0
      %494 = vmatprep.subr.mxu0 0.0
      %495 = vmatpush1.msra.mxu0 0.0
      %496 = vmatprep.subr.mxu0 0.0
      %497 = vmatpush1.msra.mxu0 0.0
      %498 = vmatprep.subr.mxu0 0.0
      %499 = vmatpush1.msra.mxu0 0.0
      %500 = vmatprep.subr.mxu0 0.0
      %501 = vmatpush1.msra.mxu0 0.0
      %502 = vmatprep.mubr.f32.mxu0 0.0
      %503 = vmatmul.mubr.f32.gmra.mrb[0].mxu0 %v436
      %v504 = vpop.f32.mrb[0].mxu0
      %v505 = vadd.f32 %v432, %v504
      %v506 = vpop.f32.mrb[0].mxu0
      %507 = vdwg.mxu0
      %v508 = vmul.f32 %v505, 0.5
      %v509 = vtanh.pop %v508
      %v510 = vmul.f32 %v509, 0.5
      %v511 = vadd.f32 %v510, 0.5
      %v512 = vld [vmem:[%s5] sm:$0xff]
      %v513 = vld [vmem:[%s5 + $0x8] sm:$0xff]
      %v514 = vld [vmem:[%s5 + $0x10] sm:$0xff]
      %v515 = vld [vmem:[%s5 + $0x18] sm:$0xff]
      %v516 = vld [vmem:[%s6] sm:$0x1]
      %v518 = vlaneseq
      %v519 = vshrl.u32 %v518, 7
      %v520 = vsub.s32 0, %v519
      %v521 = vrot.slane %v516, %v520
      %vm523 = vcmask 261120
      %v525 = vsel %vm523, %v511, 0
      %527 = vmatprep.subr.mxu0 0.0
      %528 = vmatpush1.msra.mxu0 %v512
      %529 = vmatprep.subr.mxu0 0.0
      %530 = vmatpush1.msra.mxu0 %v513
      %531 = vmatprep.subr.mxu0 0.0
      %532 = vmatpush1.msra.mxu0 %v514
      %533 = vmatprep.subr.mxu0 0.0
      %534 = vmatpush1.msra.mxu0 %v515
      %535 = vmatprep.subr.mxu0 0.0
      %536 = vmatpush1.msra.mxu0 0.0
      %537 = vmatprep.subr.mxu0 0.0
      %538 = vmatpush1.msra.mxu0 0.0
      %539 = vmatprep.subr.mxu0 0.0
      %540 = vmatpush1.msra.mxu0 0.0
      %541 = vmatprep.subr.mxu0 0.0
      %542 = vmatpush1.msra.mxu0 0.0
      %543 = vmatprep.subr.mxu0 0.0
      %544 = vmatpush1.msra.mxu0 0.0
      %545 = vmatprep.subr.mxu0 0.0
      %546 = vmatpush1.msra.mxu0 0.0
      %547 = vmatprep.subr.mxu0 0.0
      %548 = vmatpush1.msra.mxu0 0.0
      %549 = vmatprep.subr.mxu0 0.0
      %550 = vmatpush1.msra.mxu0 0.0
      %551 = vmatprep.subr.mxu0 0.0
      %552 = vmatpush1.msra.mxu0 0.0
      %553 = vmatprep.subr.mxu0 0.0
      %554 = vmatpush1.msra.mxu0 0.0
      %555 = vmatprep.subr.mxu0 0.0
      %556 = vmatpush1.msra.mxu0 0.0
      %557 = vmatprep.subr.mxu0 0.0
      %558 = vmatpush1.msra.mxu0 0.0
      %559 = vmatprep.subr.mxu0 0.0
      %560 = vmatpush1.msra.mxu0 0.0
      %561 = vmatprep.subr.mxu0 0.0
      %562 = vmatpush1.msra.mxu0 0.0
      %563 = vmatprep.subr.mxu0 0.0
      %564 = vmatpush1.msra.mxu0 0.0
      %565 = vmatprep.subr.mxu0 0.0
      %566 = vmatpush1.msra.mxu0 0.0
      %567 = vmatprep.subr.mxu0 0.0
      %568 = vmatpush1.msra.mxu0 0.0
      %569 = vmatprep.subr.mxu0 0.0
      %570 = vmatpush1.msra.mxu0 0.0
      %571 = vmatprep.subr.mxu0 0.0
      %572 = vmatpush1.msra.mxu0 0.0
      %573 = vmatprep.subr.mxu0 0.0
      %574 = vmatpush1.msra.mxu0 0.0
      %575 = vmatprep.subr.mxu0 0.0
      %576 = vmatpush1.msra.mxu0 0.0
      %577 = vmatprep.subr.mxu0 0.0
      %578 = vmatpush1.msra.mxu0 0.0
      %579 = vmatprep.subr.mxu0 0.0
      %580 = vmatpush1.msra.mxu0 0.0
      %581 = vmatprep.subr.mxu0 0.0
      %582 = vmatpush1.msra.mxu0 0.0
      %583 = vmatprep.subr.mxu0 0.0
      %584 = vmatpush1.msra.mxu0 0.0
      %585 = vmatprep.subr.mxu0 0.0
      %586 = vmatpush1.msra.mxu0 0.0
      %587 = vmatprep.subr.mxu0 0.0
      %588 = vmatpush1.msra.mxu0 0.0
      %589 = vmatprep.subr.mxu0 0.0
      %590 = vmatpush1.msra.mxu0 0.0
      %591 = vmatprep.mubr.f32.mxu0 0.0
      %592 = vmatmul.mubr.f32.gmra.mrb[0].mxu0 %v525
      %v593 = vpop.f32.mrb[0].mxu0
      %v594 = vadd.f32 %v521, %v593
      %v595 = vpop.f32.mrb[0].mxu0
      %596 = vdwg.mxu0
      %v597 = vmul.f32 %v594, 0.5
      %v598 = vtanh.pop %v597
      %v599 = vmul.f32 %v598, 0.5
      %v600 = vadd.f32 %v599, 0.5
      %v601 = vld [vmem:[%s7] sm:$0xff]
      %v602 = vld [vmem:[%s7 + $0x8] sm:$0xff]
      %v603 = vld [vmem:[%s8] sm:$0x1]
      %v605 = vlaneseq
      %v606 = vshrl.u32 %v605, 7
      %v607 = vsub.s32 0, %v606
      %v608 = vrot.slane %v603, %v607
      %vm610 = vcmask 130048
      %v612 = vsel %vm610, %v600, 0
      %614 = vmatprep.subr.mxu0 0.0
      %615 = vmatpush1.msra.mxu0 %v601
      %616 = vmatprep.subr.mxu0 0.0
      %617 = vmatpush1.msra.mxu0 %v602
      %618 = vmatprep.subr.mxu0 0.0
      %619 = vmatpush1.msra.mxu0 0.0
      %620 = vmatprep.subr.mxu0 0.0
      %621 = vmatpush1.msra.mxu0 0.0
      %622 = vmatprep.subr.mxu0 0.0
      %623 = vmatpush1.msra.mxu0 0.0
      %624 = vmatprep.subr.mxu0 0.0
      %625 = vmatpush1.msra.mxu0 0.0
      %626 = vmatprep.subr.mxu0 0.0
      %627 = vmatpush1.msra.mxu0 0.0
      %628 = vmatprep.subr.mxu0 0.0
      %629 = vmatpush1.msra.mxu0 0.0
      %630 = vmatprep.subr.mxu0 0.0
      %631 = vmatpush1.msra.mxu0 0.0
      %632 = vmatprep.subr.mxu0 0.0
      %633 = vmatpush1.msra.mxu0 0.0
      %634 = vmatprep.subr.mxu0 0.0
      %635 = vmatpush1.msra.mxu0 0.0
      %636 = vmatprep.subr.mxu0 0.0
      %637 = vmatpush1.msra.mxu0 0.0
      %638 = vmatprep.subr.mxu0 0.0
      %639 = vmatpush1.msra.mxu0 0.0
      %640 = vmatprep.subr.mxu0 0.0
      %641 = vmatpush1.msra.mxu0 0.0
      %642 = vmatprep.subr.mxu0 0.0
      %643 = vmatpush1.msra.mxu0 0.0
      %644 = vmatprep.subr.mxu0 0.0
      %645 = vmatpush1.msra.mxu0 0.0
      %646 = vmatprep.subr.mxu0 0.0
      %647 = vmatpush1.msra.mxu0 0.0
      %648 = vmatprep.subr.mxu0 0.0
      %649 = vmatpush1.msra.mxu0 0.0
      %650 = vmatprep.subr.mxu0 0.0
      %651 = vmatpush1.msra.mxu0 0.0
      %652 = vmatprep.subr.mxu0 0.0
      %653 = vmatpush1.msra.mxu0 0.0
      %654 = vmatprep.subr.mxu0 0.0
      %655 = vmatpush1.msra.mxu0 0.0
      %656 = vmatprep.subr.mxu0 0.0
      %657 = vmatpush1.msra.mxu0 0.0
      %658 = vmatprep.subr.mxu0 0.0
      %659 = vmatpush1.msra.mxu0 0.0
      %660 = vmatprep.subr.mxu0 0.0
      %661 = vmatpush1.msra.mxu0 0.0
      %662 = vmatprep.subr.mxu0 0.0
      %663 = vmatpush1.msra.mxu0 0.0
      %664 = vmatprep.subr.mxu0 0.0
      %665 = vmatpush1.msra.mxu0 0.0
      %666 = vmatprep.subr.mxu0 0.0
      %667 = vmatpush1.msra.mxu0 0.0
      %668 = vmatprep.subr.mxu0 0.0
      %669 = vmatpush1.msra.mxu0 0.0
      %670 = vmatprep.subr.mxu0 0.0
      %671 = vmatpush1.msra.mxu0 0.0
      %672 = vmatprep.subr.mxu0 0.0
      %673 = vmatpush1.msra.mxu0 0.0
      %674 = vmatprep.subr.mxu0 0.0
      %675 = vmatpush1.msra.mxu0 0.0
      %676 = vmatprep.subr.mxu0 0.0
      %677 = vmatpush1.msra.mxu0 0.0
      %678 = vmatprep.mubr.f32.mxu0 0.0
      %679 = vmatmul.mubr.f32.gmra.mrb[0].mxu0 %v612
      %v680 = vpop.f32.mrb[0].mxu0
      %v681 = vadd.f32 %v608, %v680
      %v682 = vpop.f32.mrb[0].mxu0
      %683 = vdwg.mxu0
      %vm684 = vcmask 64512
      %685 = vst.msk [vmem:[%s327] sm:$0xff] %vm684, %v681
      %p686 = scmp.lt.s32.totalorder %s20, 1
      %s687 = scalar_select %p686, %s20, 1
      %s688 = smul.addr %s687, 8
      %s689 = scalar_lea.vmem %s9, %s688
      // Predicated region
      $region57: #{tpu_custom_call.1} parent=55 // pred_check
        %p690 = pneg %p232
      $region58: #{tpu_custom_call.1} parent=55 // pred_check_branch
        %692 = sbr.rel (%p690) target = $region60
      $region59: #{tpu_custom_call.1} parent=55 // pred_region
        _
      $region60: #{tpu_custom_call.1} parent=55 // pred_fallthru
        _
    $region56: #{tpu_custom_call.1} parent=5 // pred_fallthru
      _
    %p693 = scmp.le.s32.totalorder 2, %s15
    // Predicated region
    $region61: #{tpu_custom_call.1} parent=5 // pred_check
      %p694 = pneg %p693
    $region62: #{tpu_custom_call.1} parent=5 // pred_check_branch
      %696 = sbr.rel (%p694) target = $region64
    $region63: #{tpu_custom_call.1} parent=5 // pred_region
      %s697 = ssub.s32 %s15, 2
      // Predicated region
      $region65: #{tpu_custom_call.1} parent=63 // pred_check
        %p698 = pneg %p238
      $region66: #{tpu_custom_call.1} parent=63 // pred_check_branch
        %700 = sbr.rel (%p698) target = $region68
      $region67: #{tpu_custom_call.1} parent=63 // pred_region
        %p701 = scmp.lt.s32.totalorder %s21, 1
        %s702 = scalar_select %p701, %s21, 1
        %s703 = smul.addr %s702, 8
        %s704 = scalar_lea.vmem %s9, %s703
      $region68: #{tpu_custom_call.1} parent=63 // pred_fallthru
        _
    $region64: #{tpu_custom_call.1} parent=5 // pred_fallthru
      _
  $region6: #{tpu_custom_call.1} parent=0 // loop_footer
    %s19 = sadd.s32 1, %s15
  $region7: #{tpu_custom_call.1} parent=0 // loop_footer_branch
    %14 = sbr.rel target = $region3
  $region8: #{tpu_custom_call.1} parent=0 // loop_exit
    _

</llo_original>
